<compile_context>
chip_gen: v6e
topology: v6e:2x2x1
jax: 0.10.0
libtpu: 0.0.40
codegen_flags: <defaults>
</compile_context>

<pallas_src>
import functools

import jax
import jax.numpy as jnp
from jax import lax
from jax.experimental import pallas as pl
from jax.experimental.pallas import tpu as pltpu

KN = 3                                 # self.kn in the reference module
_NEG_INF = float("-inf")
_RESIDENT_K_BYTES = 24 * 1024 * 1024   # budget for double-buffered bf16 resident K
_VMEM_LIMIT = 48 * 1024 * 1024         # <= 48 MiB keeps v7x (64 MiB/TC) safe


def _round_up(x, m):
    return ((x + m - 1) // m) * m


# ---------------------------------------------------------------------------
# Kernel 1: fused cosine-similarity + streaming top-KN neighbor indices.
#   grid = (B, q_tiles, k_tiles); k axis last ("arbitrary"), running top-3
#   in VMEM scratch.  Inside each grid step the K tile is consumed in
#   `chunk`-row slabs; s is oriented (keys=sublanes, queries=lanes) so every
#   per-query reduction/state array is a compact (1, tq).
# ---------------------------------------------------------------------------
def _cos_topk_kernel(q_ref, k_ref, idx_ref, vals, inds, *,
                     n_valid, k_tile, chunk, masked):
    kt = pl.program_id(2)

    @pl.when(kt == 0)
    def _init():
        vals[...] = jnp.full(vals.shape, _NEG_INF, vals.dtype)
        inds[...] = jnp.zeros(inds.shape, inds.dtype)

    q = q_ref[0]                                               # (tq, D) bf16, unit rows
    rows = lax.broadcasted_iota(jnp.int32, (chunk, 1), 0)      # local key index
    n_chunks = k_tile // chunk
    k_base = kt * k_tile

    def chunk_body(c, carry):
        v1, v2, v3, i1, i2, i3 = carry                          # each (1, tq)
        start = pl.multiple_of(c * chunk, chunk)
        kc = k_ref[0, pl.ds(start, chunk), :]                   # (chunk, D) bf16
        # s[r, :] = <key r, all queries>; bf16 operands feed the MXU, f32 acc.
        s = lax.dot_general(kc, q, (((1,), (1,)), ((), ())),
                            preferred_element_type=jnp.float32)  # (chunk, tq)
        base = k_base + c * chunk
        if masked:                               # static: mask padded key rows
            s = jnp.where(rows + base < n_valid, s, _NEG_INF)
        for _ in range(KN):
            m = jnp.max(s, axis=0, keepdims=True)                        # (1, tq)
            mi_loc = jnp.min(jnp.where(s >= m, rows, 2 ** 30),
                             axis=0, keepdims=True)                      # lowest idx
            s = jnp.where(rows == mi_loc, _NEG_INF, s)                   # pop it
            mi = mi_loc + base
            # Insert (m, mi) into the sorted running top-3 (v1 >= v2 >= v3);
            # strict > keeps -inf candidates from corrupting the state.
            gt1, gt2, gt3 = m > v1, m > v2, m > v3
            nv1 = jnp.where(gt1, m, v1)
            ni1 = jnp.where(gt1, mi, i1)
            nv2 = jnp.where(gt1, v1, jnp.where(gt2, m, v2))
            ni2 = jnp.where(gt1, i1, jnp.where(gt2, mi, i2))
            nv3 = jnp.where(gt2, v2, jnp.where(gt3, m, v3))
            ni3 = jnp.where(gt2, i2, jnp.where(gt3, mi, i3))
            v1, v2, v3, i1, i2, i3 = nv1, nv2, nv3, ni1, ni2, ni3
        return v1, v2, v3, i1, i2, i3

    carry0 = (vals[0], vals[1], vals[2], inds[0], inds[1], inds[2])
    v1, v2, v3, i1, i2, i3 = lax.fori_loop(0, n_chunks, chunk_body, carry0,
                                           unroll=(n_chunks <= 8))
    vals[0], vals[1], vals[2] = v1, v2, v3
    inds[0], inds[1], inds[2] = i1, i2, i3

    @pl.when(kt == pl.num_programs(2) - 1)
    def _finalize():
        r = lax.broadcasted_iota(jnp.int32, (KN, 1), 0)
        idx_ref[0] = jnp.where(r == 0, i1, jnp.where(r == 1, i2, i3))   # (KN, tq)


def cos_topk_indices(feats_n):
    """feats_n: (B, N, D) L2-normalized rows (bf16) -> top-KN indices (B, N, KN)."""
    B, N, D = feats_n.shape
    if N <= 128:                                  # single tile covers everything
        n_pad = _round_up(N, 8)
        tq = k_tile = chunk = n_pad
    else:
        chunk, tq = 128, 256
        n_pad = _round_up(N, tq)
        if 2 * n_pad * D * 2 <= _RESIDENT_K_BYTES:
            k_tile = n_pad                        # K resident: DMA'd once per batch
        else:
            k_tile = 512                          # streamed K tiles
            n_pad = _round_up(N, k_tile)
    if n_pad != N:
        feats_n = jnp.pad(feats_n, ((0, 0), (0, n_pad - N), (0, 0)))
    q_tiles, k_tiles = n_pad // tq, n_pad // k_tile

    kernel = functools.partial(_cos_topk_kernel, n_valid=N, k_tile=k_tile,
                               chunk=chunk, masked=(n_pad != N))
    idx = pl.pallas_call(
        kernel,
        out_shape=jax.ShapeDtypeStruct((B, KN, n_pad), jnp.int32),
        grid=(B, q_tiles, k_tiles),
        in_specs=[pl.BlockSpec((1, tq, D), lambda b, qi, kt: (b, qi, 0)),
                  pl.BlockSpec((1, k_tile, D), lambda b, qi, kt: (b, kt, 0))],
        # queries along lanes -> lane-dense index output (tq >= 128 when tiled)
        out_specs=pl.BlockSpec((1, KN, tq), lambda b, qi, kt: (b, 0, qi)),
        scratch_shapes=[pltpu.VMEM((KN, 1, tq), jnp.float32),
                        pltpu.VMEM((KN, 1, tq), jnp.int32)],
        compiler_params=pltpu.CompilerParams(
            dimension_semantics=("parallel", "parallel", "arbitrary"),
            vmem_limit_bytes=_VMEM_LIMIT),
    )(feats_n, feats_n)
    return jnp.transpose(idx[:, :, :N], (0, 2, 1))               # (B, N, KN)


# ---------------------------------------------------------------------------
# Kernel 2: fused ConvMapping + (dropout=identity) + Linear(no bias) + ReLU
#   as one tiled GEMM over the collapsed M = B*N axis; FC weight stays
#   resident in VMEM; neighbors streamed as bf16; output lane-padded to 128.
# ---------------------------------------------------------------------------
def _trans_fc_kernel(wconv_ref, bconv_ref, nb_ref, wt_ref, o_ref):
    w0, w1, w2 = wconv_ref[0], wconv_ref[1], wconv_ref[2]
    bc = bconv_ref[0]
    # ConvMapping == Conv1d(kn, 1, 1): weighted sum over kn neighbors + bias.
    xt = (w0 * nb_ref[0].astype(jnp.float32)
          + w1 * nb_ref[1].astype(jnp.float32)
          + w2 * nb_ref[2].astype(jnp.float32) + bc)              # (tm, D) f32
    # Dropout(p=0.1) is identity in eval mode.
    y = lax.dot_general(xt.astype(jnp.bfloat16), wt_ref[...],
                        (((1,), (0,)), ((), ())),
                        preferred_element_type=jnp.float32)       # (tm, d_pad)
    o_ref[...] = jnp.maximum(y, 0.0)


def trans_fc_relu(neighbors, w_conv, b_conv, w_fc, *, max_tile=512):
    """neighbors (KN, M, D) bf16 -> relu((sum_k w_k*nb_k + b) @ w_fc^T): (M, dim_out)."""
    _, M, D = neighbors.shape
    dim_out = w_fc.shape[0]
    d_pad = _round_up(dim_out, 128)              # lane-dense output stores
    tm = min(max_tile, _round_up(M, 8))
    m_pad = _round_up(M, tm)
    if m_pad != M:
        neighbors = jnp.pad(neighbors, ((0, 0), (0, m_pad - M), (0, 0)))
    wt = jnp.zeros((D, d_pad), jnp.bfloat16).at[:, :dim_out].set(
        w_fc.T.astype(jnp.bfloat16))
    smem = pl.BlockSpec(memory_space=pltpu.MemorySpace.SMEM)
    out = pl.pallas_call(
        _trans_fc_kernel,
        out_shape=jax.ShapeDtypeStruct((m_pad, d_pad), jnp.float32),
        grid=(m_pad // tm,),
        in_specs=[smem, smem,
                  pl.BlockSpec((KN, tm, D), lambda m: (0, m, 0)),
                  pl.BlockSpec((D, d_pad), lambda m: (0, 0))],    # resident weight
        out_specs=pl.BlockSpec((tm, d_pad), lambda m: (m, 0)),
        compiler_params=pltpu.CompilerParams(
            dimension_semantics=("parallel",),
            vmem_limit_bytes=_VMEM_LIMIT),
    )(w_conv.astype(jnp.float32), b_conv.astype(jnp.float32), neighbors, wt)
    return out[:M, :dim_out]


# ---------------------------------------------------------------------------
# Full forward
# ---------------------------------------------------------------------------
def nearest_convolution(feats, edge_dict, params):
    """feats: (B, N, D) float32 -> (B, N, dim_out) float32 (eval mode)."""
    del edge_dict  # unused in the reference forward pass
    B, N, D = feats.shape
    # F.normalize(x, p=2): x * rsqrt(max(||x||^2, 1e-24)); done once in XLA,
    # bf16 feed halves kernel-1's dominant HBM stream.
    ss = jnp.sum(feats * feats, axis=-1, keepdims=True)
    feats_n = (feats * lax.rsqrt(jnp.maximum(ss, 1e-24))).astype(jnp.bfloat16)
    idx = cos_topk_indices(feats_n)                                # (B, N, KN)
    # One bf16 gather into a (KN, B*N, D) slab (B and N collapsed into the
    # GEMM M axis for kernel 2).
    flat = feats.astype(jnp.bfloat16).reshape(B * N, D)
    gidx = idx + (jnp.arange(B, dtype=idx.dtype) * N)[:, None, None]  # (B,N,KN)
    gidx = gidx.reshape(B * N, KN).T                               # (KN, B*N)
    neighbors = jnp.take(flat, gidx, axis=0)                       # (KN, B*N, D) bf16
    out = trans_fc_relu(neighbors, params["w_conv"], params["b_conv"],
                        params["w_fc"])                            # (B*N, dim_out)
    return out.reshape(B, N, -1)


if __name__ == "__main__":
    B, N, D, DIM_OUT = 2, 16, 32, 32
    key = jax.random.PRNGKey(0)
    k_feats, k_fc, k_conv, k_bias = jax.random.split(key, 4)

    feats = jax.random.normal(k_feats, (B, N, D), dtype=jnp.float32)

    params = {
        # nn.Linear(dim_in, dim_out, bias=False).weight : (dim_out, dim_in)
        "w_fc": jax.random.normal(k_fc, (DIM_OUT, D), dtype=jnp.float32)
        / jnp.sqrt(float(D)),
        # ConvMapping ~ Conv1d(kn, 1, 1): weight (kn,), bias scalar
        "w_conv": jax.random.normal(k_conv, (KN,), dtype=jnp.float32)
        / jnp.sqrt(float(KN)),
        "b_conv": 0.1 * jax.random.normal(k_bias, (1,), dtype=jnp.float32),
    }

    out = nearest_convolution(feats, edge_dict=None, params=params)
    out = jax.block_until_ready(out)
    assert out.shape == (B, N, DIM_OUT)
    assert out.dtype == jnp.float32
    assert bool(jnp.all(out >= 0.0))  # ReLU output

    # Sanity checks: the most-similar neighbor must be the row itself, and the
    # fused ConvMapping+FC+ReLU must match a plain-JAX reference built from the
    # kernel's own neighbor selection (bf16 MXU feed -> loose tolerance).
    ss = jnp.sum(feats * feats, axis=-1, keepdims=True)
    feats_n = (feats * lax.rsqrt(jnp.maximum(ss, 1e-24))).astype(jnp.bfloat16)
    idx = cos_topk_indices(feats_n)
    assert bool(jnp.all(idx[:, :, 0] == jnp.arange(N, dtype=idx.dtype)[None, :]))
    knn = jax.vmap(lambda f, ix: f[ix])(feats, idx)                # (B,N,KN,D)
    xt = jnp.einsum("k,bnkd->bnd", params["w_conv"], knn) + params["b_conv"][0]
    ref = jnp.maximum(jnp.einsum("bnd,od->bno", xt, params["w_fc"]), 0.0)
    assert bool(jnp.allclose(out, ref, atol=1e-1, rtol=5e-2))

    print("KERNEL_OK")
</pallas_src>

<mosaic_0001>
module attributes {stable_mosaic.version = 11 : i64} {
  func.func @_cos_topk_kernel(%arg0: i32, %arg1: i32, %arg2: i32, %arg3: memref<1x16x32xbf16, #tpu.memory_space<vmem>>, %arg4: memref<1x16x32xbf16, #tpu.memory_space<vmem>>, %arg5: memref<1x3x16xi32, #tpu.memory_space<vmem>>, %arg6: memref<3x1x16xf32, #tpu.memory_space<vmem>>, %arg7: memref<3x1x16xi32, #tpu.memory_space<vmem>>) attributes {dimension_semantics = [#tpu.dimension_semantics<parallel>, #tpu.dimension_semantics<parallel>, #tpu.dimension_semantics<arbitrary>], iteration_bounds = array<i64: 2, 1, 1>, scalar_prefetch = 0 : i64, scratch_operands = 2 : i64, tpu.core_type = #tpu.core_type<tc>, window_params = [{transform_indices = @transform_0, window_bounds = array<i64: 1, 16, 32>}, {transform_indices = @transform_1, window_bounds = array<i64: 1, 16, 32>}, {transform_indices = @transform_2, window_bounds = array<i64: 1, 3, 16>}]} {
    %c0_i32 = arith.constant 0 : i32
    %0 = arith.cmpi eq, %arg2, %c0_i32 : i32
    %1 = arith.extui %0 : i1 to i32
    %c0_i32_0 = arith.constant 0 : i32
    %2 = arith.cmpi ne, %1, %c0_i32_0 : i32
    scf.if %2 {
      %cst_54 = arith.constant 0xFF800000 : f32
      %133 = vector.broadcast %cst_54 : f32 to vector<3x1x16xf32>
      %c0_55 = arith.constant 0 : index
      %c0_56 = arith.constant 0 : index
      %c0_57 = arith.constant 0 : index
      %134 = vector.load %arg6[%c0_55, %c0_56, %c0_57] : memref<3x1x16xf32, #tpu.memory_space<vmem>>, vector<3x1x16xf32>
      tpu.vector_store %arg6[%c0_55, %c0_56, %c0_57], %133 {strides = array<i32>} : memref<3x1x16xf32, #tpu.memory_space<vmem>>, vector<3x1x16xf32>,
      %c0_i32_58 = arith.constant 0 : i32
      %135 = vector.broadcast %c0_i32_58 : i32 to vector<3x1x16xi32>
      %c0_59 = arith.constant 0 : index
      %c0_60 = arith.constant 0 : index
      %c0_61 = arith.constant 0 : index
      %136 = vector.load %arg7[%c0_59, %c0_60, %c0_61] : memref<3x1x16xi32, #tpu.memory_space<vmem>>, vector<3x1x16xi32>
      tpu.vector_store %arg7[%c0_59, %c0_60, %c0_61], %135 {strides = array<i32>} : memref<3x1x16xi32, #tpu.memory_space<vmem>>, vector<3x1x16xi32>,
    } else {
    }
    %c0 = arith.constant 0 : index
    %c0_1 = arith.constant 0 : index
    %c0_2 = arith.constant 0 : index
    %3 = vector.load %arg3[%c0, %c0_1, %c0_2] : memref<1x16x32xbf16, #tpu.memory_space<vmem>>, vector<1x16x32xbf16>
    %4 = vector.shape_cast %3 : vector<1x16x32xbf16> to vector<16x32xbf16>
    %5 = tpu.iota {dimensions = array<i32: 0>} : vector<16x1xi32>
    %c16_i32 = arith.constant 16 : i32
    %6 = arith.muli %arg2, %c16_i32 : i32
    %c0_3 = arith.constant 0 : index
    %c0_4 = arith.constant 0 : index
    %c0_5 = arith.constant 0 : index
    %7 = vector.load %arg6[%c0_3, %c0_4, %c0_5] : memref<3x1x16xf32, #tpu.memory_space<vmem>>, vector<1x1x16xf32>
    %8 = vector.shape_cast %7 : vector<1x1x16xf32> to vector<1x16xf32>
    %c1 = arith.constant 1 : index
    %c0_6 = arith.constant 0 : index
    %c0_7 = arith.constant 0 : index
    %9 = vector.load %arg6[%c1, %c0_6, %c0_7] : memref<3x1x16xf32, #tpu.memory_space<vmem>>, vector<1x1x16xf32>
    %10 = vector.shape_cast %9 : vector<1x1x16xf32> to vector<1x16xf32>
    %c2 = arith.constant 2 : index
    %c0_8 = arith.constant 0 : index
    %c0_9 = arith.constant 0 : index
    %11 = vector.load %arg6[%c2, %c0_8, %c0_9] : memref<3x1x16xf32, #tpu.memory_space<vmem>>, vector<1x1x16xf32>
    %12 = vector.shape_cast %11 : vector<1x1x16xf32> to vector<1x16xf32>
    %c0_10 = arith.constant 0 : index
    %c0_11 = arith.constant 0 : index
    %c0_12 = arith.constant 0 : index
    %13 = vector.load %arg7[%c0_10, %c0_11, %c0_12] : memref<3x1x16xi32, #tpu.memory_space<vmem>>, vector<1x1x16xi32>
    %14 = vector.shape_cast %13 : vector<1x1x16xi32> to vector<1x16xi32>
    %c1_13 = arith.constant 1 : index
    %c0_14 = arith.constant 0 : index
    %c0_15 = arith.constant 0 : index
    %15 = vector.load %arg7[%c1_13, %c0_14, %c0_15] : memref<3x1x16xi32, #tpu.memory_space<vmem>>, vector<1x1x16xi32>
    %16 = vector.shape_cast %15 : vector<1x1x16xi32> to vector<1x16xi32>
    %c2_16 = arith.constant 2 : index
    %c0_17 = arith.constant 0 : index
    %c0_18 = arith.constant 0 : index
    %17 = vector.load %arg7[%c2_16, %c0_17, %c0_18] : memref<3x1x16xi32, #tpu.memory_space<vmem>>, vector<1x1x16xi32>
    %18 = vector.shape_cast %17 : vector<1x1x16xi32> to vector<1x16xi32>
    %c0_i32_19 = arith.constant 0 : i32
    %c16_i32_20 = arith.constant 16 : i32
    %19 = arith.muli %c0_i32_19, %c16_i32_20 : i32
    %20 = tpu.assume_multiple %19, 16 : i32
    %c0_21 = arith.constant 0 : index
    %21 = arith.index_cast %20 : i32 to index
    %c0_22 = arith.constant 0 : index
    %22 = vector.load %arg4[%c0_21, %21, %c0_22] : memref<1x16x32xbf16, #tpu.memory_space<vmem>>, vector<1x16x32xbf16>
    %23 = vector.shape_cast %22 : vector<1x16x32xbf16> to vector<16x32xbf16>
    %cst = arith.constant dense<0.000000e+00> : vector<16x16xf32>
    %24 = tpu.matmul %23, %4, %cst {dimension_numbers = #tpu.dot_dimension_numbers<[1], [1], [0], [0], [0, 0, 1, 0], [], []>} : vector<16x32xbf16>, vector<16x32xbf16>, vector<16x16xf32> -> vector<16x16xf32>
    %c16_i32_23 = arith.constant 16 : i32
    %25 = arith.muli %c0_i32_19, %c16_i32_23 : i32
    %26 = arith.addi %6, %25 : i32
    %cst_24 = arith.constant dense<0xFF800000> : vector<16xf32>
    %27 = vector.multi_reduction <maximumf>, %24, %cst_24 [0] : vector<16x16xf32> to vector<16xf32>
    %28 = vector.shape_cast %27 : vector<16xf32> to vector<1x16xf32>
    %29 = vector.broadcast %28 : vector<1x16xf32> to vector<16x16xf32>
    %30 = arith.cmpf oge, %24, %29 : vector<16x16xf32>
    %c1073741824_i32 = arith.constant 1073741824 : i32
    %31 = vector.shape_cast %5 : vector<16x1xi32> to vector<16x1xi32>
    %32 = vector.broadcast %31 : vector<16x1xi32> to vector<16x16xi32>
    %33 = vector.broadcast %c1073741824_i32 : i32 to vector<16x16xi32>
    %34 = arith.select %30, %32, %33 : vector<16x16xi1>, vector<16x16xi32>
    %cst_25 = arith.constant dense<2147483647> : vector<16xi32>
    %35 = vector.multi_reduction <minsi>, %34, %cst_25 [0] : vector<16x16xi32> to vector<16xi32>
    %36 = vector.shape_cast %35 : vector<16xi32> to vector<1x16xi32>
    %37 = vector.broadcast %5 : vector<16x1xi32> to vector<16x16xi32>
    %38 = vector.broadcast %36 : vector<1x16xi32> to vector<16x16xi32>
    %39 = arith.cmpi eq, %37, %38 : vector<16x16xi32>
    %cst_26 = arith.constant 0xFF800000 : f32
    %40 = vector.broadcast %cst_26 : f32 to vector<16x16xf32>
    %41 = arith.select %39, %40, %24 : vector<16x16xi1>, vector<16x16xf32>
    %42 = vector.broadcast %26 : i32 to vector<1x16xi32>
    %43 = arith.addi %36, %42 : vector<1x16xi32>
    %44 = arith.cmpf ogt, %28, %8 : vector<1x16xf32>
    %45 = arith.cmpf ogt, %28, %10 : vector<1x16xf32>
    %46 = arith.cmpf ogt, %28, %12 : vector<1x16xf32>
    %47 = arith.select %44, %28, %8 : vector<1x16xi1>, vector<1x16xf32>
    %48 = arith.select %44, %43, %14 : vector<1x16xi1>, vector<1x16xi32>
    %49 = arith.select %45, %28, %10 : vector<1x16xi1>, vector<1x16xf32>
    %50 = arith.select %44, %8, %49 : vector<1x16xi1>, vector<1x16xf32>
    %51 = arith.select %45, %43, %16 : vector<1x16xi1>, vector<1x16xi32>
    %52 = arith.select %44, %14, %51 : vector<1x16xi1>, vector<1x16xi32>
    %53 = arith.select %46, %28, %12 : vector<1x16xi1>, vector<1x16xf32>
    %54 = arith.select %45, %10, %53 : vector<1x16xi1>, vector<1x16xf32>
    %55 = arith.select %46, %43, %18 : vector<1x16xi1>, vector<1x16xi32>
    %56 = arith.select %45, %16, %55 : vector<1x16xi1>, vector<1x16xi32>
    %cst_27 = arith.constant dense<0xFF800000> : vector<16xf32>
    %57 = vector.multi_reduction <maximumf>, %41, %cst_27 [0] : vector<16x16xf32> to vector<16xf32>
    %58 = vector.shape_cast %57 : vector<16xf32> to vector<1x16xf32>
    %59 = vector.broadcast %58 : vector<1x16xf32> to vector<16x16xf32>
    %60 = arith.cmpf oge, %41, %59 : vector<16x16xf32>
    %c1073741824_i32_28 = arith.constant 1073741824 : i32
    %61 = vector.shape_cast %5 : vector<16x1xi32> to vector<16x1xi32>
    %62 = vector.broadcast %61 : vector<16x1xi32> to vector<16x16xi32>
    %63 = vector.broadcast %c1073741824_i32_28 : i32 to vector<16x16xi32>
    %64 = arith.select %60, %62, %63 : vector<16x16xi1>, vector<16x16xi32>
    %cst_29 = arith.constant dense<2147483647> : vector<16xi32>
    %65 = vector.multi_reduction <minsi>, %64, %cst_29 [0] : vector<16x16xi32> to vector<16xi32>
    %66 = vector.shape_cast %65 : vector<16xi32> to vector<1x16xi32>
    %67 = vector.broadcast %5 : vector<16x1xi32> to vector<16x16xi32>
    %68 = vector.broadcast %66 : vector<1x16xi32> to vector<16x16xi32>
    %69 = arith.cmpi eq, %67, %68 : vector<16x16xi32>
    %cst_30 = arith.constant 0xFF800000 : f32
    %70 = vector.broadcast %cst_30 : f32 to vector<16x16xf32>
    %71 = arith.select %69, %70, %41 : vector<16x16xi1>, vector<16x16xf32>
    %72 = vector.broadcast %26 : i32 to vector<1x16xi32>
    %73 = arith.addi %66, %72 : vector<1x16xi32>
    %74 = arith.cmpf ogt, %58, %47 : vector<1x16xf32>
    %75 = arith.cmpf ogt, %58, %50 : vector<1x16xf32>
    %76 = arith.cmpf ogt, %58, %54 : vector<1x16xf32>
    %77 = arith.select %74, %58, %47 : vector<1x16xi1>, vector<1x16xf32>
    %78 = arith.select %74, %73, %48 : vector<1x16xi1>, vector<1x16xi32>
    %79 = arith.select %75, %58, %50 : vector<1x16xi1>, vector<1x16xf32>
    %80 = arith.select %74, %47, %79 : vector<1x16xi1>, vector<1x16xf32>
    %81 = arith.select %75, %73, %52 : vector<1x16xi1>, vector<1x16xi32>
    %82 = arith.select %74, %48, %81 : vector<1x16xi1>, vector<1x16xi32>
    %83 = arith.select %76, %58, %54 : vector<1x16xi1>, vector<1x16xf32>
    %84 = arith.select %75, %50, %83 : vector<1x16xi1>, vector<1x16xf32>
    %85 = arith.select %76, %73, %56 : vector<1x16xi1>, vector<1x16xi32>
    %86 = arith.select %75, %52, %85 : vector<1x16xi1>, vector<1x16xi32>
    %cst_31 = arith.constant dense<0xFF800000> : vector<16xf32>
    %87 = vector.multi_reduction <maximumf>, %71, %cst_31 [0] : vector<16x16xf32> to vector<16xf32>
    %88 = vector.shape_cast %87 : vector<16xf32> to vector<1x16xf32>
    %89 = vector.broadcast %88 : vector<1x16xf32> to vector<16x16xf32>
    %90 = arith.cmpf oge, %71, %89 : vector<16x16xf32>
    %c1073741824_i32_32 = arith.constant 1073741824 : i32
    %91 = vector.shape_cast %5 : vector<16x1xi32> to vector<16x1xi32>
    %92 = vector.broadcast %91 : vector<16x1xi32> to vector<16x16xi32>
    %93 = vector.broadcast %c1073741824_i32_32 : i32 to vector<16x16xi32>
    %94 = arith.select %90, %92, %93 : vector<16x16xi1>, vector<16x16xi32>
    %cst_33 = arith.constant dense<2147483647> : vector<16xi32>
    %95 = vector.multi_reduction <minsi>, %94, %cst_33 [0] : vector<16x16xi32> to vector<16xi32>
    %96 = vector.shape_cast %95 : vector<16xi32> to vector<1x16xi32>
    %97 = vector.broadcast %26 : i32 to vector<1x16xi32>
    %98 = arith.addi %96, %97 : vector<1x16xi32>
    %99 = arith.cmpf ogt, %88, %77 : vector<1x16xf32>
    %100 = arith.cmpf ogt, %88, %80 : vector<1x16xf32>
    %101 = arith.cmpf ogt, %88, %84 : vector<1x16xf32>
    %102 = arith.select %99, %88, %77 : vector<1x16xi1>, vector<1x16xf32>
    %103 = arith.select %99, %98, %78 : vector<1x16xi1>, vector<1x16xi32>
    %104 = arith.select %100, %88, %80 : vector<1x16xi1>, vector<1x16xf32>
    %105 = arith.select %99, %77, %104 : vector<1x16xi1>, vector<1x16xf32>
    %106 = arith.select %100, %98, %82 : vector<1x16xi1>, vector<1x16xi32>
    %107 = arith.select %99, %78, %106 : vector<1x16xi1>, vector<1x16xi32>
    %108 = arith.select %101, %88, %84 : vector<1x16xi1>, vector<1x16xf32>
    %109 = arith.select %100, %80, %108 : vector<1x16xi1>, vector<1x16xf32>
    %110 = arith.select %101, %98, %86 : vector<1x16xi1>, vector<1x16xi32>
    %111 = arith.select %100, %82, %110 : vector<1x16xi1>, vector<1x16xi32>
    %c1_i32 = arith.constant 1 : i32
    %c0_34 = arith.constant 0 : index
    %c0_35 = arith.constant 0 : index
    %c0_36 = arith.constant 0 : index
    %112 = vector.load %arg6[%c0_34, %c0_35, %c0_36] : memref<3x1x16xf32, #tpu.memory_space<vmem>>, vector<1x1x16xf32>
    %113 = vector.shape_cast %112 : vector<1x1x16xf32> to vector<1x16xf32>
    %114 = vector.shape_cast %102 : vector<1x16xf32> to vector<1x1x16xf32>
    tpu.vector_store %arg6[%c0_34, %c0_35, %c0_36], %114 {strides = array<i32>} : memref<3x1x16xf32, #tpu.memory_space<vmem>>, vector<1x1x16xf32>,
    %c1_37 = arith.constant 1 : index
    %c0_38 = arith.constant 0 : index
    %c0_39 = arith.constant 0 : index
    %115 = vector.load %arg6[%c1_37, %c0_38, %c0_39] : memref<3x1x16xf32, #tpu.memory_space<vmem>>, vector<1x1x16xf32>
    %116 = vector.shape_cast %115 : vector<1x1x16xf32> to vector<1x16xf32>
    %117 = vector.shape_cast %105 : vector<1x16xf32> to vector<1x1x16xf32>
    tpu.vector_store %arg6[%c1_37, %c0_38, %c0_39], %117 {strides = array<i32>} : memref<3x1x16xf32, #tpu.memory_space<vmem>>, vector<1x1x16xf32>,
    %c2_40 = arith.constant 2 : index
    %c0_41 = arith.constant 0 : index
    %c0_42 = arith.constant 0 : index
    %118 = vector.load %arg6[%c2_40, %c0_41, %c0_42] : memref<3x1x16xf32, #tpu.memory_space<vmem>>, vector<1x1x16xf32>
    %119 = vector.shape_cast %118 : vector<1x1x16xf32> to vector<1x16xf32>
    %120 = vector.shape_cast %109 : vector<1x16xf32> to vector<1x1x16xf32>
    tpu.vector_store %arg6[%c2_40, %c0_41, %c0_42], %120 {strides = array<i32>} : memref<3x1x16xf32, #tpu.memory_space<vmem>>, vector<1x1x16xf32>,
    %c0_43 = arith.constant 0 : index
    %c0_44 = arith.constant 0 : index
    %c0_45 = arith.constant 0 : index
    %121 = vector.load %arg7[%c0_43, %c0_44, %c0_45] : memref<3x1x16xi32, #tpu.memory_space<vmem>>, vector<1x1x16xi32>
    %122 = vector.shape_cast %121 : vector<1x1x16xi32> to vector<1x16xi32>
    %123 = vector.shape_cast %103 : vector<1x16xi32> to vector<1x1x16xi32>
    tpu.vector_store %arg7[%c0_43, %c0_44, %c0_45], %123 {strides = array<i32>} : memref<3x1x16xi32, #tpu.memory_space<vmem>>, vector<1x1x16xi32>,
    %c1_46 = arith.constant 1 : index
    %c0_47 = arith.constant 0 : index
    %c0_48 = arith.constant 0 : index
    %124 = vector.load %arg7[%c1_46, %c0_47, %c0_48] : memref<3x1x16xi32, #tpu.memory_space<vmem>>, vector<1x1x16xi32>
    %125 = vector.shape_cast %124 : vector<1x1x16xi32> to vector<1x16xi32>
    %126 = vector.shape_cast %107 : vector<1x16xi32> to vector<1x1x16xi32>
    tpu.vector_store %arg7[%c1_46, %c0_47, %c0_48], %126 {strides = array<i32>} : memref<3x1x16xi32, #tpu.memory_space<vmem>>, vector<1x1x16xi32>,
    %c2_49 = arith.constant 2 : index
    %c0_50 = arith.constant 0 : index
    %c0_51 = arith.constant 0 : index
    %127 = vector.load %arg7[%c2_49, %c0_50, %c0_51] : memref<3x1x16xi32, #tpu.memory_space<vmem>>, vector<1x1x16xi32>
    %128 = vector.shape_cast %127 : vector<1x1x16xi32> to vector<1x16xi32>
    %129 = vector.shape_cast %111 : vector<1x16xi32> to vector<1x1x16xi32>
    tpu.vector_store %arg7[%c2_49, %c0_50, %c0_51], %129 {strides = array<i32>} : memref<3x1x16xi32, #tpu.memory_space<vmem>>, vector<1x1x16xi32>,
    %c0_i32_52 = arith.constant 0 : i32
    %130 = arith.cmpi eq, %arg2, %c0_i32_52 : i32
    %131 = arith.extui %130 : i1 to i32
    %c0_i32_53 = arith.constant 0 : i32
    %132 = arith.cmpi ne, %131, %c0_i32_53 : i32
    scf.if %132 {
      %133 = tpu.iota {dimensions = array<i32: 0>} : vector<3x1xi32>
      %c0_i32_54 = arith.constant 0 : i32
      %134 = vector.broadcast %c0_i32_54 : i32 to vector<3x1xi32>
      %135 = arith.cmpi eq, %133, %134 : vector<3x1xi32>
      %c1_i32_55 = arith.constant 1 : i32
      %136 = vector.broadcast %c1_i32_55 : i32 to vector<3x1xi32>
      %137 = arith.cmpi eq, %133, %136 : vector<3x1xi32>
      %138 = vector.shape_cast %137 : vector<3x1xi1> to vector<3x1xi1>
      %139 = vector.broadcast %138 : vector<3x1xi1> to vector<3x16xi1>
      %140 = vector.shape_cast %107 : vector<1x16xi32> to vector<1x16xi32>
      %141 = vector.broadcast %140 : vector<1x16xi32> to vector<3x16xi32>
      %142 = vector.shape_cast %111 : vector<1x16xi32> to vector<1x16xi32>
      %143 = vector.broadcast %142 : vector<1x16xi32> to vector<3x16xi32>
      %144 = arith.select %139, %141, %143 : vector<3x16xi1>, vector<3x16xi32>
      %145 = vector.shape_cast %135 : vector<3x1xi1> to vector<3x1xi1>
      %146 = vector.broadcast %145 : vector<3x1xi1> to vector<3x16xi1>
      %147 = vector.shape_cast %103 : vector<1x16xi32> to vector<1x16xi32>
      %148 = vector.broadcast %147 : vector<1x16xi32> to vector<3x16xi32>
      %149 = arith.select %146, %148, %144 : vector<3x16xi1>, vector<3x16xi32>
      %c0_56 = arith.constant 0 : index
      %c0_57 = arith.constant 0 : index
      %c0_58 = arith.constant 0 : index
      %150 = vector.load %arg5[%c0_56, %c0_57, %c0_58] : memref<1x3x16xi32, #tpu.memory_space<vmem>>, vector<1x3x16xi32>
      %151 = vector.shape_cast %150 : vector<1x3x16xi32> to vector<3x16xi32>
      %152 = vector.shape_cast %149 : vector<3x16xi32> to vector<1x3x16xi32>
      tpu.vector_store %arg5[%c0_56, %c0_57, %c0_58], %152 {strides = array<i32>} : memref<1x3x16xi32, #tpu.memory_space<vmem>>, vector<1x3x16xi32>,
    } else {
    }
    return
  }
  func.func @transform_0(%arg0: i32, %arg1: i32, %arg2: i32) -> (i32, i32, i32) {
    %c0_i32 = arith.constant 0 : i32
    %c0_i32_0 = arith.constant 0 : i32
    return %arg0, %arg1, %c0_i32 : i32, i32, i32
  }
  func.func @transform_1(%arg0: i32, %arg1: i32, %arg2: i32) -> (i32, i32, i32) {
    %c0_i32 = arith.constant 0 : i32
    %c0_i32_0 = arith.constant 0 : i32
    return %arg0, %arg2, %c0_i32 : i32, i32, i32
  }
  func.func @transform_2(%arg0: i32, %arg1: i32, %arg2: i32) -> (i32, i32, i32) {
    %c0_i32 = arith.constant 0 : i32
    %c0_i32_0 = arith.constant 0 : i32
    return %arg0, %c0_i32, %arg1 : i32, i32, i32
  }
}

</mosaic_0001>

<llo_original>
// kernel: tpu_custom_call.1
$region0: #{tpu_custom_call.1}
  #allocation0 [shape = 'u32[]', space=smem, size = 0x4, offset = 0x4, fixed_abs, tag = 'smem constant byte address 0x4 - core index']
  #allocation1 [shape = 'u32[144,128]{1,0:T(1,128)}', space=vmem, size = 0x12000, scoped, tag = 'internal scratch']
  #allocation2 [shape = 'f32[3,1,16]{2,1,0:T(1,128)}', space=vmem, size = 0x600, scoped, tag = 'scratch operand']
  #allocation3 [shape = 's32[3,1,16]{2,1,0:T(1,128)}', space=vmem, size = 0x600, scoped, tag = 'scratch operand']
  %s0 = inlined_call_operand.hbm [shape: bf16[2,16,32], index: 0, kind: input, shape index: {}]
  %s1 = inlined_call_operand.hbm [shape: bf16[2,16,32], index: 1, kind: input, shape index: {}]
  %s2 = inlined_call_operand.vmem [shape: s32[2,3,16], index: 2, kind: output, shape index: {}]
  %s3 = sld [smem:[#allocation0]]
  $region57: #{tpu_custom_call.1} parent=0
    _
  %s5 = ssub.s32 1, %s3
  %s6 = scalar_select 0, %s5, %s3
  $region1: #{tpu_custom_call.1} parent=0
    #allocation4 [shape = 'u8[8192]{0}', space=vmem, size = 0x2000, scoped, tag = 'input window, operand 0']
    #allocation5 [shape = 's32[2]{0}', space=sflag, size = 0x8, scoped, tag = 'scoped memory for tpu_custom_call.1']
    #allocation6 [shape = 'u8[8192]{0}', space=vmem, size = 0x2000, scoped, tag = 'input window, operand 1']
    #allocation7 [shape = 's32[2]{0}', space=sflag, size = 0x8, scoped, tag = 'scoped memory for tpu_custom_call.1']
    %7 = vsyncpa [#allocation5], 0
    %s8 = scalar_lea.sflag [#allocation5], 1
    %9 = vsyncpa %s8, 0
    %10 = vsyncpa [#allocation7], 0
    %s11 = scalar_lea.sflag [#allocation7], 1
    %12 = vsyncpa %s11, 0
    loop: start=0, step=1, limit=4
    $region2: #{tpu_custom_call.1} parent=1 // loop_pre_header
      _
    $region3: #{tpu_custom_call.1} parent=1 // loop_header
      %s14 = sphi 0, %s18
      %p15 = scmp.ge.s32.totalorder %s14, 4
      %s21 = sphi 0, %s40
      %s22 = sphi 0, %s36
      %s23 = sphi 0, %s32
      %s24 = sphi 0, %s21
      %s25 = sphi 0, %s22
      %s26 = sphi 0, %s23
      %s27 = sphi 0, %s24
      %s28 = sphi 0, %s25
      %s29 = sphi 0, %s26
      %s45 = sphi 0, %s47
      %s48 = sphi 0, %s45
      %s49 = sphi 0, %s48
      %s65 = sphi 0, %s49
      %s73 = sphi 0, %s75
      %s76 = sphi 0, %s73
      %s77 = sphi 0, %s76
      %s93 = sphi 0, %s77
      %s101 = sphi 0, %s103
      %s104 = sphi 0, %s101
      %s105 = sphi 0, %s104
      %s121 = sphi 0, %s105
    $region4: #{tpu_custom_call.1} parent=1 // loop_header_branch
      %17 = sbr.rel (%p15) target = $region8
    $region5: #{tpu_custom_call.1} parent=1 // loop_body
      %s19 = ssub.s32 %s14, 1
      %s20 = ssub.s32 %s14, 2
      %s30 = sadd.s32 1, %s23
      %p31 = scmp.ge.s32.totalorder %s30, 1
      %s32 = scalar_select %p31, 0, %s30
      %s33 = sadd.s32 1, %s22
      %s34 = scalar_select %p31, %s33, %s22
      %p35 = scmp.ge.s32.totalorder %s34, 1
      %s36 = scalar_select %p35, 0, %s34
      %s37 = sadd.s32 1, %s21
      %s38 = scalar_select %p35, %s37, %s21
      %p39 = scmp.ge.s32.totalorder %s38, 2
      %s40 = scalar_select %p39, 0, %s38
      %s41 = ssub.s32 %s21, %s40
      %s42 = ssub.s32 %s22, %s36
      %s43 = sor.u32 %s41, %s42
      %p44 = scmp.eq.s32.totalorder %s43, 0
      %s46 = sadd.s32 %s45, 1
      %s47 = scalar_select %p44, %s45, %s46
      %p50 = pneg %p44
      %p51 = scmp.eq.s32.totalorder %s14, 1
      %p52 = por %p50, %p51
      %p53 = scmp.ne.s32.totalorder %s45, %s48
      %p54 = scmp.eq.s32.totalorder %s14, 0
      %p55 = por %p53, %p54
      %p56 = scmp.ne.s32.totalorder %s45, %s48
      %p57 = scmp.eq.s32.totalorder %s19, 1
      %p58 = por %p56, %p57
      %p59 = scmp.ne.s32.totalorder %s48, %s49
      %p60 = scmp.eq.s32.totalorder %s19, 0
      %p61 = por %p59, %p60
      %p62 = scmp.ne.s32.totalorder %s48, %s49
      %p63 = scmp.eq.s32.totalorder %s20, 1
      %p64 = por %p62, %p63
      %p66 = scmp.ne.s32.totalorder %s49, %s65
      %p67 = scmp.eq.s32.totalorder %s20, 0
      %p68 = por %p66, %p67
      %s69 = ssub.s32 %s21, %s40
      %s70 = ssub.s32 %s23, %s32
      %s71 = sor.u32 %s69, %s70
      %p72 = scmp.eq.s32.totalorder %s71, 0
      %s74 = sadd.s32 %s73, 1
      %s75 = scalar_select %p72, %s73, %s74
      %p78 = pneg %p72
      %p79 = scmp.eq.s32.totalorder %s14, 1
      %p80 = por %p78, %p79
      %p81 = scmp.ne.s32.totalorder %s73, %s76
      %p82 = scmp.eq.s32.totalorder %s14, 0
      %p83 = por %p81, %p82
      %p84 = scmp.ne.s32.totalorder %s73, %s76
      %p85 = scmp.eq.s32.totalorder %s19, 1
      %p86 = por %p84, %p85
      %p87 = scmp.ne.s32.totalorder %s76, %s77
      %p88 = scmp.eq.s32.totalorder %s19, 0
      %p89 = por %p87, %p88
      %p90 = scmp.ne.s32.totalorder %s76, %s77
      %p91 = scmp.eq.s32.totalorder %s20, 1
      %p92 = por %p90, %p91
      %p94 = scmp.ne.s32.totalorder %s77, %s93
      %p95 = scmp.eq.s32.totalorder %s20, 0
      %p96 = por %p94, %p95
      %s97 = ssub.s32 %s21, %s40
      %s98 = ssub.s32 %s22, %s36
      %s99 = sor.u32 %s97, %s98
      %p100 = scmp.eq.s32.totalorder %s99, 0
      %s102 = sadd.s32 %s101, 1
      %s103 = scalar_select %p100, %s101, %s102
      %p106 = pneg %p100
      %p107 = scmp.eq.s32.totalorder %s14, 1
      %p108 = por %p106, %p107
      %p109 = scmp.ne.s32.totalorder %s101, %s104
      %p110 = scmp.eq.s32.totalorder %s14, 0
      %p111 = por %p109, %p110
      %p112 = scmp.ne.s32.totalorder %s101, %s104
      %p113 = scmp.eq.s32.totalorder %s19, 1
      %p114 = por %p112, %p113
      %p115 = scmp.ne.s32.totalorder %s104, %s105
      %p116 = scmp.eq.s32.totalorder %s19, 0
      %p117 = por %p115, %p116
      %p118 = scmp.ne.s32.totalorder %s104, %s105
      %p119 = scmp.eq.s32.totalorder %s20, 1
      %p120 = por %p118, %p119
      %p122 = scmp.ne.s32.totalorder %s105, %s121
      %p123 = scmp.eq.s32.totalorder %s20, 0
      %p124 = por %p122, %p123
      %p125 = scmp.le.s32.totalorder 1, %s14
      %p126 = scmp.lt.s32.totalorder %s14, 3
      %p127 = pnand %p125, %p126
      %p128 = pneg %p127
      // Predicated region
      $region9: #{tpu_custom_call.1} parent=5 // pred_check
        _
      $region10: #{tpu_custom_call.1} parent=5 // pred_check_branch
        %130 = sbr.rel (%p127) target = $region12
      $region11: #{tpu_custom_call.1} parent=5 // pred_region
        %s131 = ssub.s32 %s14, 1
      $region12: #{tpu_custom_call.1} parent=5 // pred_fallthru
        _
      %p132 = scmp.lt.s32.totalorder %s14, 2
      // Predicated region
      $region13: #{tpu_custom_call.1} parent=5 // pred_check
        %p133 = pneg %p132
      $region14: #{tpu_custom_call.1} parent=5 // pred_check_branch
        %135 = sbr.rel (%p133) target = $region16
      $region15: #{tpu_custom_call.1} parent=5 // pred_region
        // Predicated region
        $region17: #{tpu_custom_call.1} parent=15 // pred_check
          %p136 = pneg %p55
        $region18: #{tpu_custom_call.1} parent=15 // pred_check_branch
          %138 = sbr.rel (%p136) target = $region20
        $region19: #{tpu_custom_call.1} parent=15 // pred_region
          %s139 = sand.u32 %s45, 1
          %s140 = scalar_lea.sflag [#allocation5], %s139
          %s141 = sand.u32 %s45, 1
          %s142 = smul.addr %s141, 8
          %s143 = scalar_lea.vmem [#allocation4], %s142
          %s144 = smul.u32 2, %s22
          %s146 = ssub.s32 128, 128
          %147 = vsyncadd %s140, %s146
          %s148 = smul.addr %s21, 2
          %s149 = sadd.s32 %s144, %s148
          %s150 = smul.addr %s149, 64
          %s151 = scalar_lea.hbm %s0, %s150
          %s152 = sshll.u32 %s143, 4
          %s153 = int_to_ptr.vmem [resolvable:$true] %s152
          %158 = dma.hbm_to_vmem [thread:$0]  %s151, 128, %s153, %s140, 64, 64, 4
        $region20: #{tpu_custom_call.1} parent=15 // pred_fallthru
          _
        // Predicated region
        $region21: #{tpu_custom_call.1} parent=15 // pred_check
          %p159 = pneg %p83
        $region22: #{tpu_custom_call.1} parent=15 // pred_check_branch
          %161 = sbr.rel (%p159) target = $region24
        $region23: #{tpu_custom_call.1} parent=15 // pred_region
          %s162 = sand.u32 %s73, 1
          %s163 = scalar_lea.sflag [#allocation7], %s162
          %s164 = sand.u32 %s73, 1
          %s165 = smul.addr %s164, 8
          %s166 = scalar_lea.vmem [#allocation6], %s165
          %s167 = smul.u32 2, %s23
          %s169 = ssub.s32 128, 128
          %170 = vsyncadd %s163, %s169
          %s171 = smul.addr %s21, 2
          %s172 = sadd.s32 %s167, %s171
          %s173 = smul.addr %s172, 64
          %s174 = scalar_lea.hbm %s1, %s173
          %s175 = sshll.u32 %s166, 4
          %s176 = int_to_ptr.vmem [resolvable:$true] %s175
          %181 = dma.hbm_to_vmem [thread:$0]  %s174, 128, %s176, %s163, 64, 64, 4
        $region24: #{tpu_custom_call.1} parent=15 // pred_fallthru
          _
      $region16: #{tpu_custom_call.1} parent=5 // pred_fallthru
        _
      %p182 = scmp.le.s32.totalorder 1, %s14
      %p183 = scmp.lt.s32.totalorder %s14, 3
      %p184 = pnand %p182, %p183
      %p185 = pneg %p184
      // Predicated region
      $region25: #{tpu_custom_call.1} parent=5 // pred_check
        _
      $region26: #{tpu_custom_call.1} parent=5 // pred_check_branch
        %187 = sbr.rel (%p184) target = $region28
      $region27: #{tpu_custom_call.1} parent=5 // pred_region
        %s188 = ssub.s32 %s14, 1
        %s189 = sand.u32 %s48, 1
        %s190 = scalar_lea.sflag [#allocation5], %s189
        %s191 = sand.u32 %s48, 1
        %s192 = smul.addr %s191, 8
        %s193 = scalar_lea.vmem [#allocation4], %s192
        // Predicated region
        $region29: #{tpu_custom_call.1} parent=27 // pred_check
          %p194 = pneg %p61
        $region30: #{tpu_custom_call.1} parent=27 // pred_check_branch
          %196 = sbr.rel (%p194) target = $region32
        $region31: #{tpu_custom_call.1} parent=27 // pred_region
          %197 = dma.done %s190, 128
        $region32: #{tpu_custom_call.1} parent=27 // pred_fallthru
          _
        %s198 = sand.u32 %s76, 1
        %s199 = scalar_lea.sflag [#allocation7], %s198
        %s200 = sand.u32 %s76, 1
        %s201 = smul.addr %s200, 8
        %s202 = scalar_lea.vmem [#allocation6], %s201
        // Predicated region
        $region33: #{tpu_custom_call.1} parent=27 // pred_check
          %p203 = pneg %p89
        $region34: #{tpu_custom_call.1} parent=27 // pred_check_branch
          %205 = sbr.rel (%p203) target = $region36
        $region35: #{tpu_custom_call.1} parent=27 // pred_region
          %206 = dma.done %s199, 128
        $region36: #{tpu_custom_call.1} parent=27 // pred_fallthru
          _
        %s207 = sand.u32 %s48, 1
        %s208 = scalar_lea.sflag [#allocation5], %s207
        %s209 = sand.u32 %s48, 1
        %s210 = smul.addr %s209, 8
        %s211 = scalar_lea.vmem [#allocation4], %s210
        %p212 = pneg %p61
        %p213 = pneg %p58
        %s214 = sand.u32 %s76, 1
        %s215 = scalar_lea.sflag [#allocation7], %s214
        %s216 = sand.u32 %s76, 1
        %s217 = smul.addr %s216, 8
        %s218 = scalar_lea.vmem [#allocation6], %s217
        %p219 = pneg %p89
        %p220 = pneg %p86
        %p221 = pneg %p117
        %p222 = pneg %p114
        %p223 = scmp.lt.s32.totalorder %s24, 1
        %s224 = scalar_select %p223, %s24, 1
        %p225 = scmp.lt.s32.totalorder %s25, 0
        %s226 = scalar_select %p225, %s25, 0
        %s227 = sadd.s32 %s226, %s224
        %s228 = smul.addr %s227, 4
        %s229 = scalar_lea.vmem %s2, %s228
        %s230 = smul.u32 2, %s25
        %s231 = smul.u32 2, %s26
        %p232 = scmp.lt.s32.totalorder %s24, 1
        %s233 = scalar_select %p232, %s24, 1
        %p234 = scmp.lt.s32.totalorder %s25, 0
        %s235 = scalar_select %p234, %s25, 0
        %s236 = sadd.s32 %s235, %s233
        %s237 = smul.addr %s236, 4
        %s238 = scalar_lea.vmem %s2, %s237
        %p240 = scmp.eq.s32.totalorder %s26, 0
        // Predicated region
        $region37: #{tpu_custom_call.1} parent=27 // pred_check
          %p241 = pneg %p240
        $region38: #{tpu_custom_call.1} parent=27 // pred_check_branch
          %243 = sbr.rel (%p241) target = $region40
        $region39: #{tpu_custom_call.1} parent=27 // pred_region
          %vm244 = vcmask 122880
          %245 = vst.msk [vmem:[#allocation2] sm:$0x1] %vm244, -inf
          %246 = vst.msk [vmem:[#allocation2 + $0x1] sm:$0x1] %vm244, -inf
          %247 = vst.msk [vmem:[#allocation2 + $0x2] sm:$0x1] %vm244, -inf
          %248 = vst.msk [vmem:[#allocation3] sm:$0x1] %vm244, 0
          %249 = vst.msk [vmem:[#allocation3 + $0x1] sm:$0x1] %vm244, 0
          %250 = vst.msk [vmem:[#allocation3 + $0x2] sm:$0x1] %vm244, 0
        $region40: #{tpu_custom_call.1} parent=27 // pred_fallthru
          _
        %v251 = vld [vmem:[%s193] sm:$0xf]
        %v252 = vld [vmem:[%s193 + $0x4] sm:$0xf]
        %v253 = vlaneseq
        %v254 = vshrl.u32 %v253, 7
        %v255 = vadd.s32 %v254, 8
        %s256 = smul.u32 %s26, 16
        %v257 = vld [vmem:[#allocation2] sm:$0x1]
        %s258 = scalar_lea.vmem [#allocation2], 1
        %v259 = vld [vmem:[%s258] sm:$0x1]
        %s260 = scalar_lea.vmem [#allocation2], 2
        %v261 = vld [vmem:[%s260] sm:$0x1]
        %v262 = vld [vmem:[#allocation3] sm:$0x1]
        %s263 = scalar_lea.vmem [#allocation3], 1
        %v264 = vld [vmem:[%s263] sm:$0x1]
        %s265 = scalar_lea.vmem [#allocation3], 2
        %v266 = vld [vmem:[%s265] sm:$0x1]
        %v267 = vld [vmem:[%s202] sm:$0xf]
        %v268 = vld [vmem:[%s202 + $0x4] sm:$0xf]
        %v271 = vunpack.c.l.b16 %v267
        %v272 = vunpack.c.l.b16 %v268
        %v273 = vpack.c.b16 %v272, %v271
        %v276 = vunpack.c.l.b16 %v251
        %v277 = vunpack.c.l.b16 %v252
        %v278 = vpack.c.b16 %v277, %v276
        %vm279 = vcmask 261120
        %v281 = vsel %vm279, %v273, 0
        %v284 = vsel %vm279, %v278, 0
        %286 = vmatprep.subr.bf16.mxu0 0
        %287 = vmatpush1.bf16.xpose.msra.mxu0 0
        %288 = vmatprep.subr.bf16.mxu0 0
        %289 = vmatpush1.bf16.xpose.msra.mxu0 0
        %290 = vmatprep.subr.bf16.mxu0 0
        %291 = vmatpush1.bf16.xpose.msra.mxu0 0
        %292 = vmatprep.subr.bf16.mxu0 0
        %293 = vmatpush1.bf16.xpose.msra.mxu0 0
        %294 = vmatprep.subr.bf16.mxu0 0
        %295 = vmatpush1.bf16.xpose.msra.mxu0 0
        %296 = vmatprep.subr.bf16.mxu0 0
        %297 = vmatpush1.bf16.xpose.msra.mxu0 0
        %298 = vmatprep.subr.bf16.mxu0 0
        %299 = vmatpush1.bf16.xpose.msra.mxu0 0
        %300 = vmatprep.subr.bf16.mxu0 0
        %301 = vmatpush1.bf16.xpose.msra.mxu0 %v284
        %302 = vmatprep.subr.bf16.mxu0 0
        %303 = vmatpush2.bf16.xpose.msra.mxu0 0
        %304 = vmatprep.subr.bf16.mxu0 0
        %305 = vmatpush2.bf16.xpose.msra.mxu0 0
        %306 = vmatprep.subr.bf16.mxu0 0
        %307 = vmatpush2.bf16.xpose.msra.mxu0 0
        %308 = vmatprep.subr.bf16.mxu0 0
        %309 = vmatpush2.bf16.xpose.msra.mxu0 0
        %310 = vmatprep.subr.bf16.mxu0 0
        %311 = vmatpush2.bf16.xpose.msra.mxu0 0
        %312 = vmatprep.subr.bf16.mxu0 0
        %313 = vmatpush2.bf16.xpose.msra.mxu0 0
        %314 = vmatprep.subr.bf16.mxu0 0
        %315 = vmatpush2.bf16.xpose.msra.mxu0 0
        %316 = vmatprep.subr.bf16.mxu0 0
        %317 = vmatpush2.bf16.xpose.msra.mxu0 0
        %318 = vmatprep.mubr.bf16.mxu0 0
        %319 = vmatmul.mubr.bf16.gmra.mxu0 %v281
        %v320 = vpop.f32.mrf.mxu0
        %v321 = vadd.f32 0.0, %v320
        %v322 = vpop.f32.mrf.mxu0
        %v323 = vpop.f32.mrf.mxu0
        %v324 = vadd.f32 0.0, %v323
        %v325 = vpop.f32.mrf.mxu0
        %326 = vdwg.mxu0
        %vm327 = vcmask 130048
        %v328 = vsel %vm327, %v321, -inf
        %v329 = vsel %vm327, %v324, -inf
        %v330 = vmax.f32 %v328, %v329
        %v331 = vrot.slane %v330, 4
        %v332 = vmax.f32 %v330, %v331
        %v333 = vrot.slane %v332, 2
        %v334 = vmax.f32 %v332, %v333
        %v335 = vrot.slane %v334, 1
        %v336 = vmax.f32 %v334, %v335
        %vm337 = vcmp.ge.f32.partialorder %v321, %v336
        %vm338 = vcmp.ge.f32.partialorder %v324, %v336
        %v339 = vsel %vm337, %v254, 1073741824
        %v340 = vsel %vm338, %v255, 1073741824
        %v341 = vsel %vm327, %v339, 2147483647
        %v342 = vsel %vm327, %v340, 2147483647
        %vm343 = vcmp.lt.s32.totalorder %v341, %v342
        %v344 = vsel %vm343, %v341, %v342
        %v345 = vrot.slane %v344, 4
        %vm346 = vcmp.lt.s32.totalorder %v344, %v345
        %v347 = vsel %vm346, %v344, %v345
        %v348 = vrot.slane %v347, 2
        %vm349 = vcmp.lt.s32.totalorder %v347, %v348
        %v350 = vsel %vm349, %v347, %v348
        %v351 = vrot.slane %v350, 1
        %vm352 = vcmp.lt.s32.totalorder %v350, %v351
        %v353 = vsel %vm352, %v350, %v351
        %vm354 = vcmp.eq.s32.totalorder %v254, %v353
        %vm355 = vcmp.eq.s32.totalorder %v255, %v353
        %v356 = vsel %vm354, -inf, %v321
        %v357 = vsel %vm355, -inf, %v324
        %v358 = vstv %s256
        %v359 = vadd.s32 %v353, %v358
        %vm360 = vcmp.gt.f32.partialorder %v336, %v257
        %vm361 = vcmp.gt.f32.partialorder %v336, %v259
        %vm362 = vcmp.gt.f32.partialorder %v336, %v261
        %v363 = vsel %vm360, %v336, %v257
        %v364 = vsel %vm360, %v359, %v262
        %v365 = vsel %vm361, %v336, %v259
        %v366 = vsel %vm360, %v257, %v365
        %v367 = vsel %vm361, %v359, %v264
        %v368 = vsel %vm360, %v262, %v367
        %v369 = vsel %vm362, %v336, %v261
        %v370 = vsel %vm361, %v259, %v369
        %v371 = vsel %vm362, %v359, %v266
        %v372 = vsel %vm361, %v264, %v371
        %v373 = vsel %vm327, %v356, -inf
        %v374 = vsel %vm327, %v357, -inf
        %v375 = vmax.f32 %v373, %v374
        %v376 = vrot.slane %v375, 4
        %v377 = vmax.f32 %v375, %v376
        %v378 = vrot.slane %v377, 2
        %v379 = vmax.f32 %v377, %v378
        %v380 = vrot.slane %v379, 1
        %v381 = vmax.f32 %v379, %v380
        %vm382 = vcmp.ge.f32.partialorder %v356, %v381
        %vm383 = vcmp.ge.f32.partialorder %v357, %v381
        %v384 = vsel %vm382, %v254, 1073741824
        %v385 = vsel %vm383, %v255, 1073741824
        %v386 = vsel %vm327, %v384, 2147483647
        %v387 = vsel %vm327, %v385, 2147483647
        %vm388 = vcmp.lt.s32.totalorder %v386, %v387
        %v389 = vsel %vm388, %v386, %v387
        %v390 = vrot.slane %v389, 4
        %vm391 = vcmp.lt.s32.totalorder %v389, %v390
        %v392 = vsel %vm391, %v389, %v390
        %v393 = vrot.slane %v392, 2
        %vm394 = vcmp.lt.s32.totalorder %v392, %v393
        %v395 = vsel %vm394, %v392, %v393
        %v396 = vrot.slane %v395, 1
        %vm397 = vcmp.lt.s32.totalorder %v395, %v396
        %v398 = vsel %vm397, %v395, %v396
        %vm399 = vcmp.eq.s32.totalorder %v254, %v398
        %vm400 = vcmp.eq.s32.totalorder %v255, %v398
        %v401 = vsel %vm399, -inf, %v356
        %v402 = vsel %vm400, -inf, %v357
        %v403 = vadd.s32 %v398, %v358
        %vm404 = vcmp.gt.f32.partialorder %v381, %v363
        %vm405 = vcmp.gt.f32.partialorder %v381, %v366
        %vm406 = vcmp.gt.f32.partialorder %v381, %v370
        %v407 = vsel %vm404, %v381, %v363
        %v408 = vsel %vm404, %v403, %v364
        %v409 = vsel %vm405, %v381, %v366
        %v410 = vsel %vm404, %v363, %v409
        %v411 = vsel %vm405, %v403, %v368
        %v412 = vsel %vm404, %v364, %v411
        %v413 = vsel %vm406, %v381, %v370
        %v414 = vsel %vm405, %v366, %v413
        %v415 = vsel %vm406, %v403, %v372
        %v416 = vsel %vm405, %v368, %v415
        %v417 = vsel %vm327, %v401, -inf
        %v418 = vsel %vm327, %v402, -inf
        %v419 = vmax.f32 %v417, %v418
        %v420 = vrot.slane %v419, 4
        %v421 = vmax.f32 %v419, %v420
        %v422 = vrot.slane %v421, 2
        %v423 = vmax.f32 %v421, %v422
        %v424 = vrot.slane %v423, 1
        %v425 = vmax.f32 %v423, %v424
        %vm426 = vcmp.ge.f32.partialorder %v401, %v425
        %vm427 = vcmp.ge.f32.partialorder %v402, %v425
        %v428 = vsel %vm426, %v254, 1073741824
        %v429 = vsel %vm427, %v255, 1073741824
        %v430 = vsel %vm327, %v428, 2147483647
        %v431 = vsel %vm327, %v429, 2147483647
        %vm432 = vcmp.lt.s32.totalorder %v430, %v431
        %v433 = vsel %vm432, %v430, %v431
        %v434 = vrot.slane %v433, 4
        %vm435 = vcmp.lt.s32.totalorder %v433, %v434
        %v436 = vsel %vm435, %v433, %v434
        %v437 = vrot.slane %v436, 2
        %vm438 = vcmp.lt.s32.totalorder %v436, %v437
        %v439 = vsel %vm438, %v436, %v437
        %v440 = vrot.slane %v439, 1
        %vm441 = vcmp.lt.s32.totalorder %v439, %v440
        %v442 = vsel %vm441, %v439, %v440
        %v443 = vadd.s32 %v442, %v358
        %vm444 = vcmp.gt.f32.partialorder %v425, %v407
        %vm445 = vcmp.gt.f32.partialorder %v425, %v410
        %vm446 = vcmp.gt.f32.partialorder %v425, %v414
        %v447 = vsel %vm444, %v425, %v407
        %v448 = vsel %vm444, %v443, %v408
        %v449 = vsel %vm445, %v425, %v410
        %v450 = vsel %vm444, %v407, %v449
        %v451 = vsel %vm445, %v443, %v412
        %v452 = vsel %vm444, %v408, %v451
        %v453 = vsel %vm446, %v425, %v414
        %v454 = vsel %vm445, %v410, %v453
        %v455 = vsel %vm446, %v443, %v416
        %v456 = vsel %vm445, %v412, %v455
        %vm457 = vcmask 122880
        %458 = vst.msk [vmem:[#allocation2] sm:$0x1] %vm457, %v447
        %459 = vst.msk [vmem:[%s258] sm:$0x1] %vm457, %v450
        %460 = vst.msk [vmem:[%s260] sm:$0x1] %vm457, %v454
        %461 = vst.msk [vmem:[#allocation3] sm:$0x1] %vm457, %v448
        %462 = vst.msk [vmem:[%s263] sm:$0x1] %vm457, %v452
        %463 = vst.msk [vmem:[%s265] sm:$0x1] %vm457, %v456
        // Predicated region
        $region41: #{tpu_custom_call.1} parent=27 // pred_check
          %p464 = pneg %p240
        $region42: #{tpu_custom_call.1} parent=27 // pred_check_branch
          %466 = sbr.rel (%p464) target = $region44
        $region43: #{tpu_custom_call.1} parent=27 // pred_region
          %vm467 = vcmp.eq.s32.totalorder %v254, 0
          %vm468 = vcmp.eq.s32.totalorder %v254, 1
          %v469 = vsel %vm468, 1, 0
          %vm470 = vcmp.eq.s32.totalorder %v469, 1
          %v471 = vlaneseq
          %v472 = vshrl.u32 %v471, 7
          %v473 = vsub.s32 0, %v472
          %v474 = vrot.slane %v452, %v473
          %v475 = vlaneseq
          %v476 = vshrl.u32 %v475, 7
          %v477 = vsub.s32 0, %v476
          %v478 = vrot.slane %v456, %v477
          %v479 = vsel %vm470, %v474, %v478
          %v480 = vsel %vm467, 1, 0
          %vm481 = vcmp.eq.s32.totalorder %v480, 1
          %v482 = vlaneseq
          %v483 = vshrl.u32 %v482, 7
          %v484 = vsub.s32 0, %v483
          %v485 = vrot.slane %v448, %v484
          %v486 = vsel %vm481, %v485, %v479
          %vm487 = vcmask 124928
          %488 = vst.msk [vmem:[%s238] sm:$0x7] %vm487, %v486
        $region44: #{tpu_custom_call.1} parent=27 // pred_fallthru
          _
        %p489 = scmp.lt.s32.totalorder %s24, 1
        %s490 = scalar_select %p489, %s24, 1
        %p491 = scmp.lt.s32.totalorder %s25, 0
        %s492 = scalar_select %p491, %s25, 0
        %s493 = sadd.s32 %s492, %s490
        %s494 = smul.addr %s493, 4
        %s495 = scalar_lea.vmem %s2, %s494
        // Predicated region
        $region45: #{tpu_custom_call.1} parent=27 // pred_check
          %p496 = pneg %p114
        $region46: #{tpu_custom_call.1} parent=27 // pred_check_branch
          %498 = sbr.rel (%p496) target = $region48
        $region47: #{tpu_custom_call.1} parent=27 // pred_region
          _
        $region48: #{tpu_custom_call.1} parent=27 // pred_fallthru
          _
      $region28: #{tpu_custom_call.1} parent=5 // pred_fallthru
        _
      %p499 = scmp.le.s32.totalorder 2, %s14
      // Predicated region
      $region49: #{tpu_custom_call.1} parent=5 // pred_check
        %p500 = pneg %p499
      $region50: #{tpu_custom_call.1} parent=5 // pred_check_branch
        %502 = sbr.rel (%p500) target = $region52
      $region51: #{tpu_custom_call.1} parent=5 // pred_region
        %s503 = ssub.s32 %s14, 2
        // Predicated region
        $region53: #{tpu_custom_call.1} parent=51 // pred_check
          %p504 = pneg %p120
        $region54: #{tpu_custom_call.1} parent=51 // pred_check_branch
          %506 = sbr.rel (%p504) target = $region56
        $region55: #{tpu_custom_call.1} parent=51 // pred_region
          %p507 = scmp.lt.s32.totalorder %s27, 1
          %s508 = scalar_select %p507, %s27, 1
          %p509 = scmp.lt.s32.totalorder %s28, 0
          %s510 = scalar_select %p509, %s28, 0
          %s511 = sadd.s32 %s510, %s508
          %s512 = smul.addr %s511, 4
          %s513 = scalar_lea.vmem %s2, %s512
        $region56: #{tpu_custom_call.1} parent=51 // pred_fallthru
          _
      $region52: #{tpu_custom_call.1} parent=5 // pred_fallthru
        _
    $region6: #{tpu_custom_call.1} parent=1 // loop_footer
      %s18 = sadd.s32 1, %s14
    $region7: #{tpu_custom_call.1} parent=1 // loop_footer_branch
      %13 = sbr.rel target = $region3
    $region8: #{tpu_custom_call.1} parent=1 // loop_exit
      _
    %514 = vsyncpa [#allocation5], 1
    %s515 = scalar_lea.sflag [#allocation5], 1
    %516 = vsyncpa %s515, 1
    %517 = vsyncpa [#allocation7], 1
    %s518 = scalar_lea.sflag [#allocation7], 1
    %519 = vsyncpa %s518, 1

</llo_original>
